<compile_context>
chip_gen: v6e
topology: v6e:2x2x1
jax: 0.10.0
libtpu: 0.0.40
codegen_flags: <defaults>
</compile_context>

<pallas_src>
import jax
import jax.numpy as jnp
from jax import lax
from jax.experimental import pallas as pl
from jax.experimental.pallas import tpu as pltpu


# ----------------------------------------------------------------------------
# Path 1: small vocab -- table resident in VMEM, one-hot gather on the MXU.
# ----------------------------------------------------------------------------
def _embed_onehot_kernel(ids_ref, table_ref, out_ref):
    # ids_ref:   (T, 1)      int32 VMEM  token ids for this tile
    # table_ref: (vocab, D)  VMEM        full embedding table (resident)
    # out_ref:   (T, D)      VMEM        embedded tokens (sublane/lane dense)
    tile_t = out_ref.shape[0]
    vocab = table_ref.shape[0]
    ids = ids_ref[...]                                           # (T, 1)
    iota = lax.broadcasted_iota(jnp.int32, (tile_t, vocab), 1)   # (T, vocab)
    onehot = (ids == iota).astype(table_ref.dtype)               # (T, vocab)
    out_ref[...] = jnp.dot(
        onehot, table_ref[...], preferred_element_type=jnp.float32
    ).astype(out_ref.dtype)


def _embed_onehot(ids_padded, table, tile_t):
    n_pad = ids_padded.shape[0]
    vocab, embed_dim = table.shape
    dtype_bytes = jnp.dtype(table.dtype).itemsize
    cost = pl.CostEstimate(
        flops=2 * n_pad * vocab * embed_dim,
        transcendentals=0,
        bytes_accessed=(vocab * embed_dim + n_pad * embed_dim) * dtype_bytes
        + n_pad * 4,
    )
    return pl.pallas_call(
        _embed_onehot_kernel,
        out_shape=jax.ShapeDtypeStruct((n_pad, embed_dim), table.dtype),
        grid_spec=pltpu.PrefetchScalarGridSpec(
            num_scalar_prefetch=0,
            grid=(n_pad // tile_t,),
            in_specs=[
                pl.BlockSpec((tile_t, 1), lambda i: (i, 0)),
                # Full-extent block + constant index -> table DMA'd once and
                # kept resident in VMEM across all grid steps.
                pl.BlockSpec((vocab, embed_dim), lambda i: (0, 0)),
            ],
            out_specs=pl.BlockSpec((tile_t, embed_dim), lambda i: (i, 0)),
        ),
        compiler_params=pltpu.CompilerParams(
            dimension_semantics=("parallel",),
            vmem_limit_bytes=32 * 1024 * 1024,
        ),
        cost_estimate=cost,
    )(ids_padded.reshape(n_pad, 1), table)


# ----------------------------------------------------------------------------
# Path 2: large vocab -- table in HBM, per-row async-copy gather straight into
#         the pipelined output tile (no VMEM scratch, no extra copy).
# ----------------------------------------------------------------------------
def _embed_dma_kernel(ids_ref, table_hbm, out_ref, sems):
    # ids_ref:   (n_pad,)   int32 SMEM (scalar prefetch)
    # table_hbm: (vocab, D) HBM ref (memory_space=pl.ANY)
    # out_ref:   (T, D)     VMEM output tile (DMA destination)
    # sems:      (T,)       DMA semaphores (one per in-flight row copy)
    tile_t = out_ref.shape[0]
    base = pl.program_id(0) * tile_t

    def issue(t, carry):
        row = ids_ref[base + t]
        pltpu.make_async_copy(
            table_hbm.at[pl.ds(row, 1)], out_ref.at[pl.ds(t, 1)], sems.at[t]
        ).start()
        return carry

    # unroll=8: lets the scalar core pipeline SMEM loads + descriptor pushes.
    lax.fori_loop(0, tile_t, issue, 0, unroll=8)

    def drain(t, carry):
        # Same transfer size as the issued copy; only the semaphore matters.
        pltpu.make_async_copy(
            table_hbm.at[pl.ds(0, 1)], out_ref.at[pl.ds(t, 1)], sems.at[t]
        ).wait()
        return carry

    lax.fori_loop(0, tile_t, drain, 0, unroll=8)


def _embed_dma(ids_padded, table, tile_t):
    n_pad = ids_padded.shape[0]
    vocab, embed_dim = table.shape
    dtype_bytes = jnp.dtype(table.dtype).itemsize
    cost = pl.CostEstimate(
        flops=0,
        transcendentals=0,
        bytes_accessed=2 * n_pad * embed_dim * dtype_bytes + n_pad * 4,
    )
    return pl.pallas_call(
        _embed_dma_kernel,
        out_shape=jax.ShapeDtypeStruct((n_pad, embed_dim), table.dtype),
        grid_spec=pltpu.PrefetchScalarGridSpec(
            num_scalar_prefetch=1,
            grid=(n_pad // tile_t,),
            in_specs=[pl.BlockSpec(memory_space=pl.ANY)],
            out_specs=pl.BlockSpec((tile_t, embed_dim), lambda i, ids: (i, 0)),
            scratch_shapes=[
                pltpu.SemaphoreType.DMA((tile_t,)),
            ],
        ),
        compiler_params=pltpu.CompilerParams(
            dimension_semantics=("parallel",),
        ),
        cost_estimate=cost,
    )(ids_padded, table)


# ----------------------------------------------------------------------------
# Wrapper (== PyTorch WordEmbedding.forward)
# ----------------------------------------------------------------------------
def _pick_tile(n_tok, cap):
    if n_tok >= cap:
        return cap
    # Multiple of 16 keeps output tiles sublane-dense for f32 and bf16.
    return max(16, ((n_tok + 15) // 16) * 16)


def word_embedding(x, table, *, force_path=None):
    """out[b, s, :] = table[x[b, s], :]  (nn.Embedding forward)."""
    vocab_size, embed_dim = table.shape
    batch, seq = x.shape
    n_tok = batch * seq

    # TODO(synk): PyTorch raises on out-of-range ids; we clamp instead.
    ids = jnp.clip(x.reshape(n_tok).astype(jnp.int32), 0, vocab_size - 1)

    table_bytes = vocab_size * embed_dim * jnp.dtype(table.dtype).itemsize
    small_table = table_bytes <= 6 * 1024 * 1024 and vocab_size <= 2048
    path = force_path or ("vmem" if small_table else "hbm")

    tile_t = _pick_tile(n_tok, 256 if path == "vmem" else 128)
    n_pad = pl.cdiv(n_tok, tile_t) * tile_t
    ids_padded = jnp.pad(ids, (0, n_pad - n_tok))  # pad with id 0 (valid row)

    if path == "vmem":
        out_flat = _embed_onehot(ids_padded, table, tile_t)
    else:
        out_flat = _embed_dma(ids_padded, table, tile_t)

    return out_flat[:n_tok].reshape(batch, seq, embed_dim)


def init_word_embedding_params(key, vocab_size, embed_dim, dtype=jnp.float32):
    # nn.Embedding default init: weight ~ N(0, 1)
    return jax.random.normal(key, (vocab_size, embed_dim), dtype=dtype)


if __name__ == "__main__":
    vocab_size = 64
    embed_dim = 128
    batch, seq = 2, 8

    key = jax.random.PRNGKey(0)
    k_table, k_ids = jax.random.split(key)

    table = init_word_embedding_params(k_table, vocab_size, embed_dim)
    x = jax.random.randint(k_ids, (batch, seq), 0, vocab_size, dtype=jnp.int32)

    ref = table[x]  # plain JAX gather == PyTorch nn.Embedding forward

    # Auto-selected path for this small vocab: VMEM-resident table + one-hot MXU.
    out_vmem = jax.block_until_ready(word_embedding(x, table))
    assert out_vmem.shape == (batch, seq, embed_dim)
    assert jnp.allclose(out_vmem, ref), "VMEM one-hot path mismatch vs reference"

    # Exercise the large-vocab fallback (HBM per-row DMA gather) as well.
    out_hbm = jax.block_until_ready(word_embedding(x, table, force_path="hbm"))
    assert jnp.allclose(out_hbm, ref), "HBM DMA-gather path mismatch vs reference"

    print("KERNEL_OK")
</pallas_src>

<mosaic_0001>
module attributes {stable_mosaic.version = 11 : i64} {
  func.func @_embed_onehot_kernel(%arg0: i32, %arg1: memref<16x1xi32, #tpu.memory_space<vmem>>, %arg2: memref<64x128xf32, #tpu.memory_space<vmem>>, %arg3: memref<16x128xf32, #tpu.memory_space<vmem>>) attributes {dimension_semantics = [#tpu.dimension_semantics<parallel>], iteration_bounds = array<i64: 1>, scalar_prefetch = 0 : i64, scratch_operands = 0 : i64, tpu.core_type = #tpu.core_type<tc>, window_params = [{transform_indices = @transform_0, window_bounds = array<i64: 16, 1>}, {pipeline_mode = #tpu.pipeline_mode<synchronous>, transform_indices = @transform_1, window_bounds = array<i64: 64, 128>}, {transform_indices = @transform_2, window_bounds = array<i64: 16, 128>}]} {
    %c0 = arith.constant 0 : index
    %c0_0 = arith.constant 0 : index
    %0 = vector.load %arg1[%c0, %c0_0] : memref<16x1xi32, #tpu.memory_space<vmem>>, vector<16x1xi32>
    %1 = tpu.iota {dimensions = array<i32: 1>} : vector<16x64xi32>
    %2 = vector.broadcast %0 : vector<16x1xi32> to vector<16x64xi32>
    %3 = arith.cmpi eq, %2, %1 : vector<16x64xi32>
    %4 = arith.extui %3 : vector<16x64xi1> to vector<16x64xi32>
    %5 = arith.sitofp %4 : vector<16x64xi32> to vector<16x64xf32>
    %c0_1 = arith.constant 0 : index
    %c0_2 = arith.constant 0 : index
    %6 = vector.load %arg2[%c0_1, %c0_2] : memref<64x128xf32, #tpu.memory_space<vmem>>, vector<64x128xf32>
    %cst = arith.constant dense<0.000000e+00> : vector<16x128xf32>
    %7 = tpu.matmul %5, %6, %cst {dimension_numbers = #tpu.dot_dimension_numbers<[1], [0], [0], [1], [0, 0, 1, 1], [], []>} : vector<16x64xf32>, vector<64x128xf32>, vector<16x128xf32> -> vector<16x128xf32>
    %c0_3 = arith.constant 0 : index
    %c0_4 = arith.constant 0 : index
    %8 = vector.load %arg3[%c0_3, %c0_4] : memref<16x128xf32, #tpu.memory_space<vmem>>, vector<16x128xf32>
    tpu.vector_store %arg3[%c0_3, %c0_4], %7 {strides = array<i32>} : memref<16x128xf32, #tpu.memory_space<vmem>>, vector<16x128xf32>,
    return
  }
  func.func @transform_0(%arg0: i32) -> (i32, i32) {
    %c0_i32 = arith.constant 0 : i32
    %c0_i32_0 = arith.constant 0 : i32
    return %arg0, %c0_i32 : i32, i32
  }
  func.func @transform_1(%arg0: i32) -> (i32, i32) {
    %c0_i32 = arith.constant 0 : i32
    %c0_i32_0 = arith.constant 0 : i32
    %c0_i32_1 = arith.constant 0 : i32
    return %c0_i32, %c0_i32_0 : i32, i32
  }
  func.func @transform_2(%arg0: i32) -> (i32, i32) {
    %c0_i32 = arith.constant 0 : i32
    %c0_i32_0 = arith.constant 0 : i32
    return %arg0, %c0_i32 : i32, i32
  }
}

</mosaic_0001>

<llo_original>
// kernel: tpu_custom_call.1
$region0: #{tpu_custom_call.1}
  #allocation0 [shape = 'u32[]', space=smem, size = 0x4, offset = 0x4, fixed_abs, tag = 'smem constant byte address 0x4 - core index']
  #allocation1 [shape = 'u32[144,128]{1,0:T(1,128)}', space=vmem, size = 0x12000, scoped, tag = 'internal scratch']
  %s0 = inlined_call_operand.vmem [shape: s32[16,1], index: 0, kind: input, shape index: {}]
  %s1 = inlined_call_operand.hbm [shape: f32[64,128], index: 1, kind: input, shape index: {}]
  %s2 = inlined_call_operand.hbm [shape: f32[16,128], index: 2, kind: output, shape index: {}]
  %s3 = sld [smem:[#allocation0]]
  $region22: #{tpu_custom_call.1} parent=0
    _
  %s5 = ssub.s32 1, %s3
  %s6 = scalar_select 0, %s5, %s3
  $region1: #{tpu_custom_call.1} parent=0
    #allocation2 [shape = 'u8[32768]{0}', space=vmem, size = 0x8000, scoped, tag = 'input window, operand 1, single buffered']
    #allocation3 [shape = 's32[1]{0}', space=sflag, size = 0x4, scoped, tag = 'scoped memory for tpu_custom_call.1']
    #allocation4 [shape = 's32[1]{0}', space=sflag, size = 0x4, scoped, tag = 'scoped memory for tpu_custom_call.1']
    #allocation5 [shape = 'u8[8192]{0}', space=vmem, size = 0x2000, scoped, tag = 'output window, operand 0, single buffered']
    %7 = vsyncpa [#allocation3], 0
    %8 = vsyncpa [#allocation4], 0
    // Predicated region
    $region2: #{tpu_custom_call.1} parent=1 // pred_check
      _
    $region3: #{tpu_custom_call.1} parent=1 // pred_check_branch
      %10 = sbr.rel (0) target = $region5
    $region4: #{tpu_custom_call.1} parent=1 // pred_region
      _
    $region5: #{tpu_custom_call.1} parent=1 // pred_fallthru
      _
    // Predicated region
    $region6: #{tpu_custom_call.1} parent=1 // pred_check
      _
    $region7: #{tpu_custom_call.1} parent=1 // pred_check_branch
      %12 = sbr.rel (0) target = $region9
    $region8: #{tpu_custom_call.1} parent=1 // pred_region
      %s14 = ssub.s32 1024, 1024
      %15 = vsyncadd [#allocation3], %s14
      %s16 = sshll.u32 [#allocation2], 4
      %s17 = int_to_ptr.vmem [resolvable:$true] %s16
      %22 = dma.hbm_to_vmem [thread:$0]  %s1, 1024, %s17, [#allocation3], 128, 128, 8
    $region9: #{tpu_custom_call.1} parent=1 // pred_fallthru
      _
    // Predicated region
    $region10: #{tpu_custom_call.1} parent=1 // pred_check
      _
    $region11: #{tpu_custom_call.1} parent=1 // pred_check_branch
      %24 = sbr.rel (0) target = $region13
    $region12: #{tpu_custom_call.1} parent=1 // pred_region
      %25 = dma.done [#allocation3], 1024
    $region13: #{tpu_custom_call.1} parent=1 // pred_fallthru
      _
    %v26 = vld [vmem:[%s0] sm:$0xff]
    %v27 = vld [vmem:[%s0 + $0x8] sm:$0xff]
    %v28 = vlaneseq
    %v29 = vand.u32 %v28, 127
    %30 = vset.pattern.permute.xlu0 0
    %31 = vperm.xlu0 %30, %v26
    %v32 = vpop.permute.xlu0 %31
    %33 = vset.pattern.permute.xlu0 0
    %34 = vperm.xlu0 %33, %v27
    %v35 = vpop.permute.xlu0 %34
    %vm36 = vcmp.eq.s32.totalorder %v32, %v29
    %vm37 = vcmp.eq.s32.totalorder %v35, %v29
    %v38 = vsel %vm36, 1, 0
    %v39 = vsel %vm37, 1, 0
    %v40 = vcvt.s32.f32 %v38
    %v41 = vcvt.s32.f32 %v39
    %v42 = vld [vmem:[#allocation2] sm:$0xff]
    %v43 = vld [vmem:[#allocation2 + $0x8] sm:$0xff]
    %v44 = vld [vmem:[#allocation2 + $0x10] sm:$0xff]
    %v45 = vld [vmem:[#allocation2 + $0x18] sm:$0xff]
    %v46 = vld [vmem:[#allocation2 + $0x20] sm:$0xff]
    %v47 = vld [vmem:[#allocation2 + $0x28] sm:$0xff]
    %v48 = vld [vmem:[#allocation2 + $0x30] sm:$0xff]
    %v49 = vld [vmem:[#allocation2 + $0x38] sm:$0xff]
    %vm50 = vcmask 523264
    %v52 = vsel %vm50, %v40, 0
    %v55 = vsel %vm50, %v41, 0
    %57 = vmatprep.subr.mxu0 0.0
    %58 = vmatpush1.msra.mxu0 0.0
    %59 = vmatprep.subr.mxu0 0.0
    %60 = vmatpush1.msra.mxu0 0.0
    %61 = vmatprep.subr.mxu0 0.0
    %62 = vmatpush1.msra.mxu0 0.0
    %63 = vmatprep.subr.mxu0 0.0
    %64 = vmatpush1.msra.mxu0 0.0
    %65 = vmatprep.subr.mxu0 0.0
    %66 = vmatpush1.msra.mxu0 0.0
    %67 = vmatprep.subr.mxu0 0.0
    %68 = vmatpush1.msra.mxu0 0.0
    %69 = vmatprep.subr.mxu0 0.0
    %70 = vmatpush1.msra.mxu0 0.0
    %71 = vmatprep.subr.mxu0 0.0
    %72 = vmatpush1.msra.mxu0 0.0
    %73 = vmatprep.subr.mxu0 0.0
    %74 = vmatpush1.msra.mxu0 %v49
    %75 = vmatprep.subr.mxu0 0.0
    %76 = vmatpush1.msra.mxu0 %v48
    %77 = vmatprep.subr.mxu0 0.0
    %78 = vmatpush1.msra.mxu0 %v47
    %79 = vmatprep.subr.mxu0 0.0
    %80 = vmatpush1.msra.mxu0 %v46
    %81 = vmatprep.subr.mxu0 0.0
    %82 = vmatpush1.msra.mxu0 %v45
    %83 = vmatprep.subr.mxu0 0.0
    %84 = vmatpush1.msra.mxu0 %v44
    %85 = vmatprep.subr.mxu0 0.0
    %86 = vmatpush1.msra.mxu0 %v43
    %87 = vmatprep.subr.mxu0 0.0
    %88 = vmatpush1.msra.mxu0 %v42
    %89 = vmatprep.subr.mxu0 0.0
    %90 = vmatpush2.msra.mxu0 0.0
    %91 = vmatprep.subr.mxu0 0.0
    %92 = vmatpush2.msra.mxu0 0.0
    %93 = vmatprep.subr.mxu0 0.0
    %94 = vmatpush2.msra.mxu0 0.0
    %95 = vmatprep.subr.mxu0 0.0
    %96 = vmatpush2.msra.mxu0 0.0
    %97 = vmatprep.subr.mxu0 0.0
    %98 = vmatpush2.msra.mxu0 0.0
    %99 = vmatprep.subr.mxu0 0.0
    %100 = vmatpush2.msra.mxu0 0.0
    %101 = vmatprep.subr.mxu0 0.0
    %102 = vmatpush2.msra.mxu0 0.0
    %103 = vmatprep.subr.mxu0 0.0
    %104 = vmatpush2.msra.mxu0 0.0
    %105 = vmatprep.subr.mxu0 0.0
    %106 = vmatpush2.msra.mxu0 0.0
    %107 = vmatprep.subr.mxu0 0.0
    %108 = vmatpush2.msra.mxu0 0.0
    %109 = vmatprep.subr.mxu0 0.0
    %110 = vmatpush2.msra.mxu0 0.0
    %111 = vmatprep.subr.mxu0 0.0
    %112 = vmatpush2.msra.mxu0 0.0
    %113 = vmatprep.subr.mxu0 0.0
    %114 = vmatpush2.msra.mxu0 0.0
    %115 = vmatprep.subr.mxu0 0.0
    %116 = vmatpush2.msra.mxu0 0.0
    %117 = vmatprep.subr.mxu0 0.0
    %118 = vmatpush2.msra.mxu0 0.0
    %119 = vmatprep.subr.mxu0 0.0
    %120 = vmatpush2.msra.mxu0 0.0
    %121 = vmatprep.mubr.f32.mxu0 0.0
    %122 = vmatmul.mubr.f32.gmra.mxu0 %v52
    %v123 = vpop.f32.mrf.mxu0
    %v124 = vadd.f32 0.0, %v123
    %v125 = vpop.f32.mrf.mxu0
    %126 = vmatprep.mubr.f32.mxu0 0.0
    %127 = vmatmul.mubr.f32.gmra.mxu0 %v55
    %v128 = vpop.f32.mrf.mxu0
    %v129 = vadd.f32 0.0, %v128
    %v130 = vpop.f32.mrf.mxu0
    %131 = vdwg.mxu0
    %132 = vst [vmem:[#allocation5] sm:$0xff] %v124
    %133 = vst [vmem:[#allocation5 + $0x8] sm:$0xff] %v129
    // Predicated region
    $region14: #{tpu_custom_call.1} parent=1 // pred_check
      _
    $region15: #{tpu_custom_call.1} parent=1 // pred_check_branch
      %135 = sbr.rel (0) target = $region17
    $region16: #{tpu_custom_call.1} parent=1 // pred_region
      %s137 = ssub.s32 256, 256
      %138 = vsyncadd [#allocation4], %s137
      %s139 = sshll.u32 [#allocation5], 4
      %s140 = int_to_ptr.vmem [resolvable:$true] %s139
      %145 = dma.vmem_to_hbm [thread:$0]  %s140, 256, %s2, [#allocation4], 128, 128, 8
    $region17: #{tpu_custom_call.1} parent=1 // pred_fallthru
      _
    // Predicated region
    $region18: #{tpu_custom_call.1} parent=1 // pred_check
      _
    $region19: #{tpu_custom_call.1} parent=1 // pred_check_branch
      %147 = sbr.rel (0) target = $region21
    $region20: #{tpu_custom_call.1} parent=1 // pred_region
      %148 = dma.done [#allocation4], 256
    $region21: #{tpu_custom_call.1} parent=1 // pred_fallthru
      _
    %149 = vsyncpa [#allocation3], 1
    %150 = vsyncpa [#allocation4], 1

</llo_original>
